<compile_context>
chip_gen: v6e
topology: v6e:2x2x1
jax: 0.10.0
libtpu: 0.0.40
codegen_flags: <defaults>
</compile_context>

<pallas_src>
import functools

import jax
import jax.numpy as jnp
from jax import lax
from jax.experimental import pallas as pl
from jax.experimental.pallas import tpu as pltpu


def _round_up(x: int, m: int) -> int:
    return ((x + m - 1) // m) * m


def _cluster_assignment_kernel(z_ref, ct_ref, csq_ref, o_ref, *, alpha: float):
    # z_ref  : (TB, D)      batch tile of CLS embeddings
    # ct_ref : (D, K_pad)   centers, transposed, pre-scaled by (-2/alpha),
    #                       zero in padded columns
    # csq_ref: (1, K_pad)   1 + ||mu_j||^2/alpha; padded columns poisoned to 1e30
    # o_ref  : (TB, K_pad)  lane-dense soft assignments
    z = z_ref[...]

    # MXU cross term with f32 accumulation; the -2/alpha factor is already
    # folded into ct, so cross == -2 * (z . mu) / alpha.
    cross = jnp.dot(z, ct_ref[...], preferred_element_type=jnp.float32)

    z32 = z.astype(jnp.float32)
    z_sq = jnp.sum(z32 * z32, axis=1, keepdims=True) * (1.0 / float(alpha))  # (TB,1)

    # t = 1 + ||z_i - mu_j||^2 / alpha   (>= 1 by construction)
    t = z_sq + csq_ref[...] + cross                       # (TB, K_pad)
    t = jnp.maximum(t, 1.0)                               # guard rounding below 1

    # (1 + d^2/alpha)^-1 on the EUP (vrcp) + one Newton step (~1e-8 rel error).
    y = pl.reciprocal(t, approx=True)
    base = y * (2.0 - t * y)

    power = (float(alpha) + 1.0) / 2.0
    if power == 1.0:                       # default alpha=1.0: identity, no pow
        numerator = base
    elif power == 0.5:                     # rsqrt on the EUP
        numerator = lax.rsqrt(t)
    elif power == float(int(power)) and 1.0 < power <= 4.0:
        numerator = base                   # small integer power: repeated multiply
        for _ in range(int(power) - 1):
            numerator = numerator * base
    else:                                  # general case: exp/log pow
        numerator = jnp.power(base, power)

    denom = jnp.sum(numerator, axis=1, keepdims=True)     # (TB, 1)
    o_ref[...] = (numerator * pl.reciprocal(denom, approx=False)).astype(o_ref.dtype)


def dec_forward(cls_embeddings: jax.Array,
                cluster_centers: jax.Array,
                alpha: float = 1.0,
                *,
                block_rows: int = 2048) -> jax.Array:
    """Soft cluster assignment (DEC forward, post-BERT) as a Pallas kernel.

    cls_embeddings : [B, hidden_dimension]   (f32; bf16 also supported — centers
                                              are matched to z.dtype for the MXU)
    cluster_centers: [cluster_number, hidden_dimension]
    returns        : [B, cluster_number] float32
    """
    B, D = cls_embeddings.shape
    K, D2 = cluster_centers.shape
    assert D == D2, "hidden dimension mismatch"

    LANES = 128
    SUBLANES = 8
    k_pad = _round_up(K, LANES)

    z = cls_embeddings
    z_itemsize = jnp.dtype(z.dtype).itemsize

    # ---- batch tile selection (no padding of z; Pallas masks the ragged tail) --
    if B < SUBLANES:
        tb = B                                  # block equals full batch dim
    else:
        tb = _round_up(min(block_rows, B), SUBLANES)
        if B > 2 * SUBLANES:
            # >=2 grid tiles so the "parallel" axis shards across both TCs on
            # v7x; near-zero cost on single-TC v5e/v6e (per-step ~0.35 us).
            tb = min(tb, _round_up(pl.cdiv(B, 2), SUBLANES))

    # ---- VMEM budget: double-buffered z + out tiles plus resident centers.
    # Keep under ~40 MiB so it is comfortable on v7x (64 MiB physical) and v5e.
    def _vmem_bytes(rows: int) -> int:
        zb = 2 * rows * D * z_itemsize          # z tiles (double-buffered)
        ob = 2 * rows * k_pad * 4               # output tiles (f32)
        cb = 2 * D * k_pad * z_itemsize         # resident transposed centers
        sb = 2 * SUBLANES * k_pad * 4           # resident csq row (sublane pad)
        return zb + ob + cb + sb

    VMEM_BUDGET = 40 * 1024 * 1024
    while tb > SUBLANES and _vmem_bytes(tb) > VMEM_BUDGET:
        tb = _round_up(tb // 2, SUBLANES)

    grid_b = pl.cdiv(B, tb)

    # ---- hoisted center-side work (one-time ops on the tiny (K, D) tensors) ----
    c32 = cluster_centers.astype(jnp.float32)
    c_t = jnp.transpose(c32) * (-2.0 / float(alpha))            # (D, K), pre-scaled
    c_t = jnp.pad(c_t, ((0, 0), (0, k_pad - K))).astype(z.dtype)
    c_sq = 1.0 + jnp.sum(c32 * c32, axis=1) / float(alpha)      # (K,)
    # Poison padded columns: their numerator underflows to ~1e-30, which is
    # negligible in the row sum, so no in-kernel column mask is needed.
    c_sq = jnp.pad(c_sq, (0, k_pad - K), constant_values=1e30)
    c_sq = c_sq.reshape(1, k_pad).astype(jnp.float32)

    kernel = functools.partial(_cluster_assignment_kernel, alpha=float(alpha))

    power = (float(alpha) + 1.0) / 2.0
    uses_pow = not (power == 1.0 or power == 0.5
                    or (power == float(int(power)) and 1.0 < power <= 4.0))
    cost = pl.CostEstimate(
        flops=2 * B * k_pad * D,
        transcendentals=B * k_pad * (3 if uses_pow else 1),
        bytes_accessed=B * D * z_itemsize + D * k_pad * z_itemsize
        + 4 * B * k_pad,
    )

    vmem_limit = min(max(32 * 1024 * 1024, _vmem_bytes(tb) + 4 * 1024 * 1024),
                     48 * 1024 * 1024)

    out = pl.pallas_call(
        kernel,
        out_shape=jax.ShapeDtypeStruct((B, k_pad), jnp.float32),
        grid=(grid_b,),
        in_specs=[
            pl.BlockSpec((tb, D), lambda i: (i, 0)),        # z: tiled over batch
            pl.BlockSpec((D, k_pad), lambda i: (0, 0)),     # centers: resident
            pl.BlockSpec((1, k_pad), lambda i: (0, 0)),     # 1 + ||c||^2/alpha
        ],
        out_specs=pl.BlockSpec((tb, k_pad), lambda i: (i, 0)),
        compiler_params=pltpu.CompilerParams(
            dimension_semantics=("parallel",),
            vmem_limit_bytes=vmem_limit),
        cost_estimate=cost,
    )(z, c_t, c_sq)

    return out[:, :K]


def _reference(z, centers, alpha):
    # Pure-JAX reference matching the PyTorch ClusterAssignment exactly.
    norm_sq = jnp.sum((z[:, None, :] - centers[None, :, :]) ** 2, axis=2)
    numerator = 1.0 / (1.0 + norm_sq / alpha)
    power = float(alpha + 1.0) / 2.0
    numerator = numerator ** power
    return numerator / jnp.sum(numerator, axis=1, keepdims=True)


if __name__ == "__main__":
    # Small shapes consistent with the module: cluster_number=4, hidden=32.
    batch = 8
    hidden_dimension = 32
    cluster_number = 4
    alpha = 1.0

    key = jax.random.PRNGKey(0)
    k_z, k_c = jax.random.split(key)

    # Stand-in for To_cls(batch, bertmodel): deterministic [CLS] embeddings.
    cls_embeddings = jax.random.normal(
        k_z, (batch, hidden_dimension), dtype=jnp.float32)

    # ClusterAssignment.__init__ uses xavier_uniform_; initialize in-script.
    limit = (6.0 / (cluster_number + hidden_dimension)) ** 0.5
    cluster_centers = jax.random.uniform(
        k_c, (cluster_number, hidden_dimension),
        minval=-limit, maxval=limit, dtype=jnp.float32)

    out = dec_forward(cls_embeddings, cluster_centers, alpha)
    out = jax.block_until_ready(out)

    ref = _reference(cls_embeddings, cluster_centers, alpha)
    assert out.shape == (batch, cluster_number)
    assert jnp.allclose(out, ref, atol=1e-5, rtol=1e-5), "mismatch vs reference"
    # Rows of q must sum to 1.
    assert jnp.allclose(jnp.sum(out, axis=1), 1.0, atol=1e-5)

    print("KERNEL_OK")
</pallas_src>

<mosaic_0001>
module attributes {stable_mosaic.version = 11 : i64} {
  func.func @_cluster_assignment_kernel(%arg0: i32, %arg1: memref<8x32xf32, #tpu.memory_space<vmem>>, %arg2: memref<32x128xf32, #tpu.memory_space<vmem>>, %arg3: memref<1x128xf32, #tpu.memory_space<vmem>>, %arg4: memref<8x128xf32, #tpu.memory_space<vmem>>) attributes {dimension_semantics = [#tpu.dimension_semantics<parallel>], iteration_bounds = array<i64: 1>, scalar_prefetch = 0 : i64, scratch_operands = 0 : i64, tpu.core_type = #tpu.core_type<tc>, window_params = [{transform_indices = @transform_0, window_bounds = array<i64: 8, 32>}, {pipeline_mode = #tpu.pipeline_mode<synchronous>, transform_indices = @transform_1, window_bounds = array<i64: 32, 128>}, {pipeline_mode = #tpu.pipeline_mode<synchronous>, transform_indices = @transform_2, window_bounds = array<i64: 1, 128>}, {transform_indices = @transform_3, window_bounds = array<i64: 8, 128>}]} {
    %c0 = arith.constant 0 : index
    %c0_0 = arith.constant 0 : index
    %0 = vector.load %arg1[%c0, %c0_0] : memref<8x32xf32, #tpu.memory_space<vmem>>, vector<8x32xf32>
    %c0_1 = arith.constant 0 : index
    %c0_2 = arith.constant 0 : index
    %1 = vector.load %arg2[%c0_1, %c0_2] : memref<32x128xf32, #tpu.memory_space<vmem>>, vector<32x128xf32>
    %cst = arith.constant dense<0.000000e+00> : vector<8x128xf32>
    %2 = tpu.matmul %0, %1, %cst {dimension_numbers = #tpu.dot_dimension_numbers<[1], [0], [0], [1], [0, 0, 1, 1], [], []>} : vector<8x32xf32>, vector<32x128xf32>, vector<8x128xf32> -> vector<8x128xf32>
    %3 = arith.mulf %0, %0 : vector<8x32xf32>
    %cst_3 = arith.constant dense<0.000000e+00> : vector<8xf32>
    %4 = vector.multi_reduction <add>, %3, %cst_3 [1] : vector<8x32xf32> to vector<8xf32>
    %5 = vector.shape_cast %4 : vector<8xf32> to vector<8x1xf32>
    %cst_4 = arith.constant 1.000000e+00 : f32
    %6 = vector.broadcast %cst_4 : f32 to vector<8x1xf32>
    %7 = arith.mulf %5, %6 : vector<8x1xf32>
    %c0_5 = arith.constant 0 : index
    %c0_6 = arith.constant 0 : index
    %8 = vector.load %arg3[%c0_5, %c0_6] : memref<1x128xf32, #tpu.memory_space<vmem>>, vector<1x128xf32>
    %9 = vector.broadcast %7 : vector<8x1xf32> to vector<8x128xf32>
    %10 = vector.broadcast %8 : vector<1x128xf32> to vector<8x128xf32>
    %11 = arith.addf %9, %10 : vector<8x128xf32>
    %12 = arith.addf %11, %2 : vector<8x128xf32>
    %cst_7 = arith.constant 1.000000e+00 : f32
    %13 = vector.broadcast %cst_7 : f32 to vector<8x128xf32>
    %14 = arith.maximumf %12, %13 : vector<8x128xf32>
    %15 = tpu.reciprocal %14 {approx = true} : vector<8x128xf32> -> vector<8x128xf32>
    %16 = arith.mulf %14, %15 : vector<8x128xf32>
    %cst_8 = arith.constant 2.000000e+00 : f32
    %17 = vector.broadcast %cst_8 : f32 to vector<8x128xf32>
    %18 = arith.subf %17, %16 : vector<8x128xf32>
    %19 = arith.mulf %15, %18 : vector<8x128xf32>
    %cst_9 = arith.constant dense<0.000000e+00> : vector<8xf32>
    %20 = vector.multi_reduction <add>, %19, %cst_9 [1] : vector<8x128xf32> to vector<8xf32>
    %21 = vector.shape_cast %20 : vector<8xf32> to vector<8x1xf32>
    %22 = tpu.reciprocal %21 : vector<8x1xf32> -> vector<8x1xf32>
    %23 = vector.broadcast %22 : vector<8x1xf32> to vector<8x128xf32>
    %24 = arith.mulf %19, %23 : vector<8x128xf32>
    %c0_10 = arith.constant 0 : index
    %c0_11 = arith.constant 0 : index
    %25 = vector.load %arg4[%c0_10, %c0_11] : memref<8x128xf32, #tpu.memory_space<vmem>>, vector<8x128xf32>
    tpu.vector_store %arg4[%c0_10, %c0_11], %24 {strides = array<i32>} : memref<8x128xf32, #tpu.memory_space<vmem>>, vector<8x128xf32>,
    return
  }
  func.func @transform_0(%arg0: i32) -> (i32, i32) {
    %c0_i32 = arith.constant 0 : i32
    %c0_i32_0 = arith.constant 0 : i32
    return %arg0, %c0_i32 : i32, i32
  }
  func.func @transform_1(%arg0: i32) -> (i32, i32) {
    %c0_i32 = arith.constant 0 : i32
    %c0_i32_0 = arith.constant 0 : i32
    %c0_i32_1 = arith.constant 0 : i32
    return %c0_i32, %c0_i32_0 : i32, i32
  }
  func.func @transform_2(%arg0: i32) -> (i32, i32) {
    %c0_i32 = arith.constant 0 : i32
    %c0_i32_0 = arith.constant 0 : i32
    %c0_i32_1 = arith.constant 0 : i32
    return %c0_i32, %c0_i32_0 : i32, i32
  }
  func.func @transform_3(%arg0: i32) -> (i32, i32) {
    %c0_i32 = arith.constant 0 : i32
    %c0_i32_0 = arith.constant 0 : i32
    return %arg0, %c0_i32 : i32, i32
  }
}

</mosaic_0001>

<llo_original>
// kernel: tpu_custom_call.1
$region0: #{tpu_custom_call.1}
  #allocation0 [shape = 'u32[]', space=smem, size = 0x4, offset = 0x4, fixed_abs, tag = 'smem constant byte address 0x4 - core index']
  #allocation1 [shape = 'u32[144,128]{1,0:T(1,128)}', space=vmem, size = 0x12000, scoped, tag = 'internal scratch']
  %s0 = inlined_call_operand.hbm [shape: f32[8,32], index: 0, kind: input, shape index: {}]
  %s1 = inlined_call_operand.hbm [shape: f32[32,128], index: 1, kind: input, shape index: {}]
  %s2 = inlined_call_operand.vmem [shape: f32[1,128], index: 2, kind: input, shape index: {}]
  %s3 = inlined_call_operand.hbm [shape: f32[8,128], index: 3, kind: output, shape index: {}]
  %s4 = sld [smem:[#allocation0]]
  $region30: #{tpu_custom_call.1} parent=0
    _
  %s6 = ssub.s32 1, %s4
  %s7 = scalar_select 0, %s6, %s4
  $region1: #{tpu_custom_call.1} parent=0
    #allocation2 [shape = 'u8[4096]{0}', space=vmem, size = 0x1000, scoped, tag = 'input window, operand 0, single buffered']
    #allocation3 [shape = 's32[1]{0}', space=sflag, size = 0x4, scoped, tag = 'scoped memory for tpu_custom_call.1']
    #allocation4 [shape = 's32[1]{0}', space=sflag, size = 0x4, scoped, tag = 'scoped memory for tpu_custom_call.1']
    #allocation5 [shape = 'u8[16384]{0}', space=vmem, size = 0x4000, scoped, tag = 'input window, operand 1, single buffered']
    #allocation6 [shape = 's32[1]{0}', space=sflag, size = 0x4, scoped, tag = 'scoped memory for tpu_custom_call.1']
    #allocation7 [shape = 'u8[4096]{0}', space=vmem, size = 0x1000, scoped, tag = 'output window, operand 0, single buffered']
    %8 = vsyncpa [#allocation3], 0
    %9 = vsyncpa [#allocation6], 0
    %10 = vsyncpa [#allocation4], 0
    // Predicated region
    $region2: #{tpu_custom_call.1} parent=1 // pred_check
      _
    $region3: #{tpu_custom_call.1} parent=1 // pred_check_branch
      %12 = sbr.rel (0) target = $region5
    $region4: #{tpu_custom_call.1} parent=1 // pred_region
      %s14 = ssub.s32 128, 128
      %15 = vsyncadd [#allocation3], %s14
      %s17 = sshll.u32 [#allocation2], 4
      %s18 = int_to_ptr.vmem [resolvable:$true] %s17
      %20 = dma.hbm_to_vmem [thread:$0]  %s0, 128, %s18, [#allocation3]
    $region5: #{tpu_custom_call.1} parent=1 // pred_fallthru
      _
    // Predicated region
    $region6: #{tpu_custom_call.1} parent=1 // pred_check
      _
    $region7: #{tpu_custom_call.1} parent=1 // pred_check_branch
      %22 = sbr.rel (0) target = $region9
    $region8: #{tpu_custom_call.1} parent=1 // pred_region
      %s24 = ssub.s32 512, 512
      %25 = vsyncadd [#allocation6], %s24
      %s26 = sshll.u32 [#allocation5], 4
      %s27 = int_to_ptr.vmem [resolvable:$true] %s26
      %32 = dma.hbm_to_vmem [thread:$0]  %s1, 512, %s27, [#allocation6], 128, 128, 8
    $region9: #{tpu_custom_call.1} parent=1 // pred_fallthru
      _
    // Predicated region
    $region10: #{tpu_custom_call.1} parent=1 // pred_check
      _
    $region11: #{tpu_custom_call.1} parent=1 // pred_check_branch
      %34 = sbr.rel (0) target = $region13
    $region12: #{tpu_custom_call.1} parent=1 // pred_region
      _
    $region13: #{tpu_custom_call.1} parent=1 // pred_fallthru
      _
    // Predicated region
    $region14: #{tpu_custom_call.1} parent=1 // pred_check
      _
    $region15: #{tpu_custom_call.1} parent=1 // pred_check_branch
      %36 = sbr.rel (0) target = $region17
    $region16: #{tpu_custom_call.1} parent=1 // pred_region
      %37 = dma.done [#allocation3], 128
    $region17: #{tpu_custom_call.1} parent=1 // pred_fallthru
      _
    // Predicated region
    $region18: #{tpu_custom_call.1} parent=1 // pred_check
      _
    $region19: #{tpu_custom_call.1} parent=1 // pred_check_branch
      %39 = sbr.rel (0) target = $region21
    $region20: #{tpu_custom_call.1} parent=1 // pred_region
      %40 = dma.done [#allocation6], 512
    $region21: #{tpu_custom_call.1} parent=1 // pred_fallthru
      _
    %v41 = vld [vmem:[#allocation2] sm:$0xff]
    %v42 = vld [vmem:[#allocation5] sm:$0xff]
    %v43 = vld [vmem:[#allocation5 + $0x8] sm:$0xff]
    %v44 = vld [vmem:[#allocation5 + $0x10] sm:$0xff]
    %v45 = vld [vmem:[#allocation5 + $0x18] sm:$0xff]
    %vm46 = vcmask 261120
    %v48 = vsel %vm46, %v41, 0
    %50 = vmatprep.subr.mxu0 0.0
    %51 = vmatpush1.msra.mxu0 0.0
    %52 = vmatprep.subr.mxu0 0.0
    %53 = vmatpush1.msra.mxu0 0.0
    %54 = vmatprep.subr.mxu0 0.0
    %55 = vmatpush1.msra.mxu0 0.0
    %56 = vmatprep.subr.mxu0 0.0
    %57 = vmatpush1.msra.mxu0 0.0
    %58 = vmatprep.subr.mxu0 0.0
    %59 = vmatpush1.msra.mxu0 0.0
    %60 = vmatprep.subr.mxu0 0.0
    %61 = vmatpush1.msra.mxu0 0.0
    %62 = vmatprep.subr.mxu0 0.0
    %63 = vmatpush1.msra.mxu0 0.0
    %64 = vmatprep.subr.mxu0 0.0
    %65 = vmatpush1.msra.mxu0 0.0
    %66 = vmatprep.subr.mxu0 0.0
    %67 = vmatpush1.msra.mxu0 0.0
    %68 = vmatprep.subr.mxu0 0.0
    %69 = vmatpush1.msra.mxu0 0.0
    %70 = vmatprep.subr.mxu0 0.0
    %71 = vmatpush1.msra.mxu0 0.0
    %72 = vmatprep.subr.mxu0 0.0
    %73 = vmatpush1.msra.mxu0 0.0
    %74 = vmatprep.subr.mxu0 0.0
    %75 = vmatpush1.msra.mxu0 %v45
    %76 = vmatprep.subr.mxu0 0.0
    %77 = vmatpush1.msra.mxu0 %v44
    %78 = vmatprep.subr.mxu0 0.0
    %79 = vmatpush1.msra.mxu0 %v43
    %80 = vmatprep.subr.mxu0 0.0
    %81 = vmatpush1.msra.mxu0 %v42
    %82 = vmatprep.subr.mxu0 0.0
    %83 = vmatpush2.msra.mxu0 0.0
    %84 = vmatprep.subr.mxu0 0.0
    %85 = vmatpush2.msra.mxu0 0.0
    %86 = vmatprep.subr.mxu0 0.0
    %87 = vmatpush2.msra.mxu0 0.0
    %88 = vmatprep.subr.mxu0 0.0
    %89 = vmatpush2.msra.mxu0 0.0
    %90 = vmatprep.subr.mxu0 0.0
    %91 = vmatpush2.msra.mxu0 0.0
    %92 = vmatprep.subr.mxu0 0.0
    %93 = vmatpush2.msra.mxu0 0.0
    %94 = vmatprep.subr.mxu0 0.0
    %95 = vmatpush2.msra.mxu0 0.0
    %96 = vmatprep.subr.mxu0 0.0
    %97 = vmatpush2.msra.mxu0 0.0
    %98 = vmatprep.subr.mxu0 0.0
    %99 = vmatpush2.msra.mxu0 0.0
    %100 = vmatprep.subr.mxu0 0.0
    %101 = vmatpush2.msra.mxu0 0.0
    %102 = vmatprep.subr.mxu0 0.0
    %103 = vmatpush2.msra.mxu0 0.0
    %104 = vmatprep.subr.mxu0 0.0
    %105 = vmatpush2.msra.mxu0 0.0
    %106 = vmatprep.subr.mxu0 0.0
    %107 = vmatpush2.msra.mxu0 0.0
    %108 = vmatprep.subr.mxu0 0.0
    %109 = vmatpush2.msra.mxu0 0.0
    %110 = vmatprep.subr.mxu0 0.0
    %111 = vmatpush2.msra.mxu0 0.0
    %112 = vmatprep.subr.mxu0 0.0
    %113 = vmatpush2.msra.mxu0 0.0
    %114 = vmatprep.mubr.f32.mxu0 0.0
    %115 = vmatmul.mubr.f32.gmra.mxu0 %v48
    %v116 = vpop.f32.mrf.mxu0
    %v117 = vadd.f32 0.0, %v116
    %v118 = vpop.f32.mrf.mxu0
    %119 = vdwg.mxu0
    %v120 = vmul.f32 %v41, %v41
    %v121 = vsel %vm46, %v120, 0.0
    %122 = vadd.xlane.f32.xlu0 %v121
    %v123 = vpop.xlane.xlu0 %122
    %v124 = vld [vmem:[%s2] sm:$0x1]
    %v126 = vlaneseq
    %v127 = vshrl.u32 %v126, 7
    %v128 = vsub.s32 0, %v127
    %v129 = vrot.slane %v124, %v128
    %v131 = vadd.f32 %v123, %v129
    %v132 = vadd.f32 %v131, %v117
    %v133 = vmax.f32 %v132, 1.0
    %v134 = vrcp.pop %v133
    %v135 = vmul.f32 %v133, %v134
    %v136 = vsub.f32 2.0, %v135
    %v137 = vmul.f32 %v134, %v136
    %138 = vadd.xlane.f32.xlu0 %v137
    %v139 = vpop.xlane.xlu0 %138
    %v140 = vrcp.pop %v139
    %v141 = vmul.f32 %v137, %v140
    %142 = vst [vmem:[#allocation7] sm:$0xff] %v141
    // Predicated region
    $region22: #{tpu_custom_call.1} parent=1 // pred_check
      _
    $region23: #{tpu_custom_call.1} parent=1 // pred_check_branch
      %144 = sbr.rel (0) target = $region25
    $region24: #{tpu_custom_call.1} parent=1 // pred_region
      %s146 = ssub.s32 128, 128
      %147 = vsyncadd [#allocation4], %s146
      %s149 = sshll.u32 [#allocation7], 4
      %s150 = int_to_ptr.vmem [resolvable:$true] %s149
      %152 = dma.vmem_to_hbm [thread:$0]  %s150, 128, %s3, [#allocation4]
    $region25: #{tpu_custom_call.1} parent=1 // pred_fallthru
      _
    // Predicated region
    $region26: #{tpu_custom_call.1} parent=1 // pred_check
      _
    $region27: #{tpu_custom_call.1} parent=1 // pred_check_branch
      %154 = sbr.rel (0) target = $region29
    $region28: #{tpu_custom_call.1} parent=1 // pred_region
      %155 = dma.done [#allocation4], 128
    $region29: #{tpu_custom_call.1} parent=1 // pred_fallthru
      _
    %156 = vsyncpa [#allocation3], 1
    %157 = vsyncpa [#allocation6], 1
    %158 = vsyncpa [#allocation4], 1

</llo_original>
